<compile_context>
chip_gen: v6e
topology: v6e:2x2x1
jax: 0.10.0
libtpu: 0.0.40
codegen_flags: <defaults>
</compile_context>

<pallas_src>
import functools

import jax
import jax.numpy as jnp
from jax.experimental import pallas as pl
from jax.experimental.pallas import tpu as pltpu


def _critic_kernel(x_ref, w1_ref, w23_ref, b123_ref, wq_ref, bq_ref, q_ref):
    # fc1: the 1/max_action scale is already folded into w1's action rows,
    # so a single MXU matmul on the concatenated [state, action] block suffices.
    h = jnp.dot(x_ref[...], w1_ref[...], preferred_element_type=jnp.float32)
    h = jnp.maximum(h + b123_ref[0:1, :], 0.0)

    # fc2
    h = jnp.dot(h, w23_ref[0], preferred_element_type=jnp.float32)
    h = jnp.maximum(h + b123_ref[1:2, :], 0.0)

    # fc3
    h = jnp.dot(h, w23_ref[1], preferred_element_type=jnp.float32)
    h = jnp.maximum(h + b123_ref[2:3, :], 0.0)

    # q_out: N=1 output column -> VPU multiply + lane reduction instead of a
    # wasted full-width MXU pass.
    q_ref[...] = jnp.sum(h * wq_ref[...], axis=-1, keepdims=True) + bq_ref[...]


def prepare_critic_params(params, obs_dim, max_action):
    """One-time parameter preprocessing (hoisted out of the per-call path).

    - Transposes weights to [in, out] for x @ W.
    - Folds 1/max_action into the action rows of W1.
    - Packs w2/w3 -> (2, 64, 64) and b1/b2/b3 -> (3, 64) to cut operand count.
    """
    w1_t = jnp.asarray(params["w1"], jnp.float32).T                 # [D_in, H]
    d_in = w1_t.shape[0]
    scale = jnp.concatenate([
        jnp.ones((obs_dim,), jnp.float32),
        jnp.full((d_in - obs_dim,), 1.0 / float(max_action), jnp.float32),
    ])[:, None]
    w1 = w1_t * scale                                               # scale folded in
    w23 = jnp.stack([jnp.asarray(params["w2"], jnp.float32).T,
                     jnp.asarray(params["w3"], jnp.float32).T])     # [2, H, H]
    b123 = jnp.stack([jnp.asarray(params["b1"], jnp.float32),
                      jnp.asarray(params["b2"], jnp.float32),
                      jnp.asarray(params["b3"], jnp.float32)])      # [3, H]
    wq = jnp.asarray(params["wq"], jnp.float32).reshape(1, -1)      # [1, H]
    bq = jnp.asarray(params["bq"], jnp.float32).reshape(1, 1)       # [1, 1]
    return dict(w1=w1, w23=w23, b123=b123, wq=wq, bq=bq)


def critic_forward(state_list, action_list, fake_hidden, c, prepared,
                   *, tile_b=256):
    """Pallas-backed Critic.forward. Returns (q_value, fake_hidden, c)."""
    # Glue: single concatenation of all per-agent tensors (scale is in W1).
    x = jnp.concatenate(list(state_list) + list(action_list),
                        axis=1).astype(jnp.float32)                 # [B, D_in]
    B, d_in = x.shape
    w1, w23 = prepared["w1"], prepared["w23"]
    b123, wq, bq = prepared["b123"], prepared["wq"], prepared["bq"]
    H = w1.shape[1]

    # Small batches: one whole-array block.  Large batches: 1-D grid over
    # batch, weights stay VMEM-resident (same block index every step),
    # batch axis "parallel" so it shards across TensorCores (v7x megacore).
    TB = B if B <= tile_b else tile_b
    grid = (pl.cdiv(B, TB),)

    flops = 2 * B * d_in * H + 2 * (2 * B * H * H) + 2 * B * H
    bytes_accessed = 4 * (x.size + w1.size + w23.size + b123.size
                          + wq.size + bq.size + B * 1)
    cost = pl.CostEstimate(flops=flops, transcendentals=0,
                           bytes_accessed=bytes_accessed)

    q = pl.pallas_call(
        _critic_kernel,
        out_shape=jax.ShapeDtypeStruct((B, 1), jnp.float32),
        grid=grid,
        in_specs=[
            pl.BlockSpec((TB, d_in), lambda i: (i, 0)),       # x tile
            pl.BlockSpec(w1.shape, lambda i: (0, 0)),         # resident weights
            pl.BlockSpec(w23.shape, lambda i: (0, 0, 0)),
            pl.BlockSpec(b123.shape, lambda i: (0, 0)),
            pl.BlockSpec(wq.shape, lambda i: (0, 0)),
            pl.BlockSpec(bq.shape, lambda i: (0, 0)),
        ],
        out_specs=pl.BlockSpec((TB, 1), lambda i: (i, 0)),
        compiler_params=pltpu.CompilerParams(
            dimension_semantics=("parallel",)),
        cost_estimate=cost,
    )(x, w1, w23, b123, wq, bq)

    return q, fake_hidden, c


def _init_linear(key, fan_in, fan_out):
    # Deterministic init mimicking torch.nn.Linear default: U(-1/sqrt(fan_in), +)
    kw, kb = jax.random.split(key)
    bound = 1.0 / jnp.sqrt(jnp.float32(fan_in))
    w = jax.random.uniform(kw, (fan_out, fan_in), jnp.float32, -bound, bound)
    b = jax.random.uniform(kb, (fan_out,), jnp.float32, -bound, bound)
    return w, b


def _reference_forward(state_list, action_list, params, max_action):
    # Pure-JAX reference matching the PyTorch module exactly.
    s = jnp.concatenate(state_list, axis=1)
    a = jnp.concatenate([x / max_action for x in action_list], axis=1)
    x = jnp.concatenate([s, a], axis=1)
    x = jnp.maximum(x @ params["w1"].T + params["b1"], 0.0)
    x = jnp.maximum(x @ params["w2"].T + params["b2"], 0.0)
    x = jnp.maximum(x @ params["w3"].T + params["b3"], 0.0)
    return x @ params["wq"].T + params["bq"]


if __name__ == "__main__":
    key = jax.random.PRNGKey(0)

    # Synthetic MADDPG setup: 3 agents, obs dims [8, 10, 6], action dims [4, 4, 4]
    obs_shape = [8, 10, 6]
    action_shape = [4, 4, 4]
    max_action = 2.0
    B = 8
    d_in = sum(obs_shape) + sum(action_shape)  # 36

    keys = jax.random.split(key, 16)
    w1, b1 = _init_linear(keys[0], d_in, 64)
    w2, b2 = _init_linear(keys[1], 64, 64)
    w3, b3 = _init_linear(keys[2], 64, 64)
    wq, bq = _init_linear(keys[3], 64, 1)
    params = dict(w1=w1, b1=b1, w2=w2, b2=b2, w3=w3, b3=b3, wq=wq, bq=bq)

    state_list = [jax.random.normal(keys[4 + i], (B, d), jnp.float32)
                  for i, d in enumerate(obs_shape)]
    action_list = [jax.random.normal(keys[8 + i], (B, d), jnp.float32)
                   for i, d in enumerate(action_shape)]
    fake_hidden = jax.random.normal(keys[12], (B, 64), jnp.float32)
    c = jax.random.normal(keys[13], (B, 64), jnp.float32)

    # One-time parameter preprocessing (not in the per-call path).
    prepared = prepare_critic_params(params, sum(obs_shape), max_action)
    prepared = jax.tree_util.tree_map(jax.block_until_ready, prepared)

    q, fh_out, c_out = critic_forward(state_list, action_list, fake_hidden, c,
                                      prepared)
    jax.block_until_ready(q)

    q_ref = _reference_forward(state_list, action_list, params, max_action)
    assert q.shape == (B, 1)
    assert jnp.allclose(q, q_ref, atol=1e-4, rtol=1e-4), "mismatch vs reference"
    assert fh_out is fake_hidden and c_out is c  # pass-through, like PyTorch

    print("KERNEL_OK")
</pallas_src>

<mosaic_0001>
module attributes {stable_mosaic.version = 11 : i64} {
  func.func @_critic_kernel(%arg0: i32, %arg1: memref<8x36xf32, #tpu.memory_space<vmem>>, %arg2: memref<36x64xf32, #tpu.memory_space<vmem>>, %arg3: memref<2x64x64xf32, #tpu.memory_space<vmem>>, %arg4: memref<3x64xf32, #tpu.memory_space<vmem>>, %arg5: memref<1x64xf32, #tpu.memory_space<vmem>>, %arg6: memref<1x1xf32, #tpu.memory_space<vmem>>, %arg7: memref<8x1xf32, #tpu.memory_space<vmem>>) attributes {dimension_semantics = [#tpu.dimension_semantics<parallel>], iteration_bounds = array<i64: 1>, scalar_prefetch = 0 : i64, scratch_operands = 0 : i64, tpu.core_type = #tpu.core_type<tc>, window_params = [{transform_indices = @transform_0, window_bounds = array<i64: 8, 36>}, {pipeline_mode = #tpu.pipeline_mode<synchronous>, transform_indices = @transform_1, window_bounds = array<i64: 36, 64>}, {pipeline_mode = #tpu.pipeline_mode<synchronous>, transform_indices = @transform_2, window_bounds = array<i64: 2, 64, 64>}, {pipeline_mode = #tpu.pipeline_mode<synchronous>, transform_indices = @transform_3, window_bounds = array<i64: 3, 64>}, {pipeline_mode = #tpu.pipeline_mode<synchronous>, transform_indices = @transform_4, window_bounds = array<i64: 1, 64>}, {pipeline_mode = #tpu.pipeline_mode<synchronous>, transform_indices = @transform_5, window_bounds = array<i64: 1, 1>}, {transform_indices = @transform_6, window_bounds = array<i64: 8, 1>}]} {
    %c0 = arith.constant 0 : index
    %c0_0 = arith.constant 0 : index
    %0 = vector.load %arg1[%c0, %c0_0] : memref<8x36xf32, #tpu.memory_space<vmem>>, vector<8x36xf32>
    %c0_1 = arith.constant 0 : index
    %c0_2 = arith.constant 0 : index
    %1 = vector.load %arg2[%c0_1, %c0_2] : memref<36x64xf32, #tpu.memory_space<vmem>>, vector<36x64xf32>
    %cst = arith.constant dense<0.000000e+00> : vector<8x64xf32>
    %2 = tpu.matmul %0, %1, %cst {dimension_numbers = #tpu.dot_dimension_numbers<[1], [0], [0], [1], [0, 0, 1, 1], [], []>} : vector<8x36xf32>, vector<36x64xf32>, vector<8x64xf32> -> vector<8x64xf32>
    %c0_3 = arith.constant 0 : index
    %c0_4 = arith.constant 0 : index
    %3 = vector.load %arg4[%c0_3, %c0_4] : memref<3x64xf32, #tpu.memory_space<vmem>>, vector<1x64xf32>
    %4 = vector.broadcast %3 : vector<1x64xf32> to vector<8x64xf32>
    %5 = arith.addf %2, %4 : vector<8x64xf32>
    %cst_5 = arith.constant 0.000000e+00 : f32
    %6 = vector.broadcast %cst_5 : f32 to vector<8x64xf32>
    %7 = arith.maximumf %5, %6 : vector<8x64xf32>
    %c0_6 = arith.constant 0 : index
    %c0_7 = arith.constant 0 : index
    %c0_8 = arith.constant 0 : index
    %8 = vector.load %arg3[%c0_6, %c0_7, %c0_8] : memref<2x64x64xf32, #tpu.memory_space<vmem>>, vector<1x64x64xf32>
    %9 = vector.shape_cast %8 : vector<1x64x64xf32> to vector<64x64xf32>
    %cst_9 = arith.constant dense<0.000000e+00> : vector<8x64xf32>
    %10 = tpu.matmul %7, %9, %cst_9 {dimension_numbers = #tpu.dot_dimension_numbers<[1], [0], [0], [1], [0, 0, 1, 1], [], []>} : vector<8x64xf32>, vector<64x64xf32>, vector<8x64xf32> -> vector<8x64xf32>
    %c1 = arith.constant 1 : index
    %c0_10 = arith.constant 0 : index
    %11 = vector.load %arg4[%c1, %c0_10] : memref<3x64xf32, #tpu.memory_space<vmem>>, vector<1x64xf32>
    %12 = vector.broadcast %11 : vector<1x64xf32> to vector<8x64xf32>
    %13 = arith.addf %10, %12 : vector<8x64xf32>
    %cst_11 = arith.constant 0.000000e+00 : f32
    %14 = vector.broadcast %cst_11 : f32 to vector<8x64xf32>
    %15 = arith.maximumf %13, %14 : vector<8x64xf32>
    %c1_12 = arith.constant 1 : index
    %c0_13 = arith.constant 0 : index
    %c0_14 = arith.constant 0 : index
    %16 = vector.load %arg3[%c1_12, %c0_13, %c0_14] : memref<2x64x64xf32, #tpu.memory_space<vmem>>, vector<1x64x64xf32>
    %17 = vector.shape_cast %16 : vector<1x64x64xf32> to vector<64x64xf32>
    %cst_15 = arith.constant dense<0.000000e+00> : vector<8x64xf32>
    %18 = tpu.matmul %15, %17, %cst_15 {dimension_numbers = #tpu.dot_dimension_numbers<[1], [0], [0], [1], [0, 0, 1, 1], [], []>} : vector<8x64xf32>, vector<64x64xf32>, vector<8x64xf32> -> vector<8x64xf32>
    %c2 = arith.constant 2 : index
    %c0_16 = arith.constant 0 : index
    %19 = vector.load %arg4[%c2, %c0_16] : memref<3x64xf32, #tpu.memory_space<vmem>>, vector<1x64xf32>
    %20 = vector.broadcast %19 : vector<1x64xf32> to vector<8x64xf32>
    %21 = arith.addf %18, %20 : vector<8x64xf32>
    %cst_17 = arith.constant 0.000000e+00 : f32
    %22 = vector.broadcast %cst_17 : f32 to vector<8x64xf32>
    %23 = arith.maximumf %21, %22 : vector<8x64xf32>
    %c0_18 = arith.constant 0 : index
    %c0_19 = arith.constant 0 : index
    %24 = vector.load %arg5[%c0_18, %c0_19] : memref<1x64xf32, #tpu.memory_space<vmem>>, vector<1x64xf32>
    %25 = vector.broadcast %24 : vector<1x64xf32> to vector<8x64xf32>
    %26 = arith.mulf %23, %25 : vector<8x64xf32>
    %cst_20 = arith.constant dense<0.000000e+00> : vector<8xf32>
    %27 = vector.multi_reduction <add>, %26, %cst_20 [1] : vector<8x64xf32> to vector<8xf32>
    %28 = vector.shape_cast %27 : vector<8xf32> to vector<8x1xf32>
    %c0_21 = arith.constant 0 : index
    %c0_22 = arith.constant 0 : index
    %29 = vector.load %arg6[%c0_21, %c0_22] : memref<1x1xf32, #tpu.memory_space<vmem>>, vector<1x1xf32>
    %30 = vector.broadcast %29 : vector<1x1xf32> to vector<8x1xf32>
    %31 = arith.addf %28, %30 : vector<8x1xf32>
    %c0_23 = arith.constant 0 : index
    %c0_24 = arith.constant 0 : index
    %32 = vector.load %arg7[%c0_23, %c0_24] : memref<8x1xf32, #tpu.memory_space<vmem>>, vector<8x1xf32>
    tpu.vector_store %arg7[%c0_23, %c0_24], %31 {strides = array<i32>} : memref<8x1xf32, #tpu.memory_space<vmem>>, vector<8x1xf32>,
    return
  }
  func.func @transform_0(%arg0: i32) -> (i32, i32) {
    %c0_i32 = arith.constant 0 : i32
    %c0_i32_0 = arith.constant 0 : i32
    return %arg0, %c0_i32 : i32, i32
  }
  func.func @transform_1(%arg0: i32) -> (i32, i32) {
    %c0_i32 = arith.constant 0 : i32
    %c0_i32_0 = arith.constant 0 : i32
    %c0_i32_1 = arith.constant 0 : i32
    return %c0_i32, %c0_i32_0 : i32, i32
  }
  func.func @transform_2(%arg0: i32) -> (i32, i32, i32) {
    %c0_i32 = arith.constant 0 : i32
    %c0_i32_0 = arith.constant 0 : i32
    %c0_i32_1 = arith.constant 0 : i32
    %c0_i32_2 = arith.constant 0 : i32
    return %c0_i32, %c0_i32_0, %c0_i32_1 : i32, i32, i32
  }
  func.func @transform_3(%arg0: i32) -> (i32, i32) {
    %c0_i32 = arith.constant 0 : i32
    %c0_i32_0 = arith.constant 0 : i32
    %c0_i32_1 = arith.constant 0 : i32
    return %c0_i32, %c0_i32_0 : i32, i32
  }
  func.func @transform_4(%arg0: i32) -> (i32, i32) {
    %c0_i32 = arith.constant 0 : i32
    %c0_i32_0 = arith.constant 0 : i32
    %c0_i32_1 = arith.constant 0 : i32
    return %c0_i32, %c0_i32_0 : i32, i32
  }
  func.func @transform_5(%arg0: i32) -> (i32, i32) {
    %c0_i32 = arith.constant 0 : i32
    %c0_i32_0 = arith.constant 0 : i32
    %c0_i32_1 = arith.constant 0 : i32
    return %c0_i32, %c0_i32_0 : i32, i32
  }
  func.func @transform_6(%arg0: i32) -> (i32, i32) {
    %c0_i32 = arith.constant 0 : i32
    %c0_i32_0 = arith.constant 0 : i32
    return %arg0, %c0_i32 : i32, i32
  }
}

</mosaic_0001>

<llo_original>
// kernel: tpu_custom_call.1
$region0: #{tpu_custom_call.1}
  #allocation0 [shape = 'u32[]', space=smem, size = 0x4, offset = 0x4, fixed_abs, tag = 'smem constant byte address 0x4 - core index']
  #allocation1 [shape = 'u32[144,128]{1,0:T(1,128)}', space=vmem, size = 0x12000, scoped, tag = 'internal scratch']
  #allocation2 [shape = 'f32[1,1]{1,0:T(1,128)S(1)}', space=vmem, size = 0x200, scoped, tag = 'scoped memory for tpu_custom_call.1']
  %s0 = inlined_call_operand.hbm [shape: f32[8,36], index: 0, kind: input, shape index: {}]
  %s1 = inlined_call_operand.hbm [shape: f32[36,64], index: 1, kind: input, shape index: {}]
  %s2 = inlined_call_operand.hbm [shape: f32[2,64,64], index: 2, kind: input, shape index: {}]
  %s3 = inlined_call_operand.vmem [shape: f32[3,64], index: 3, kind: input, shape index: {}]
  %s4 = inlined_call_operand.vmem [shape: f32[1,64], index: 4, kind: input, shape index: {}]
  %s5 = inlined_call_operand.<no memory space> [shape: f32[1,1], index: 5, kind: input, shape index: {}]
  %s6 = inlined_call_operand.vmem [shape: f32[8,1], index: 6, kind: output, shape index: {}]
  %s7 = sld [smem:[#allocation0]]
  $region46: #{tpu_custom_call.1} parent=0
    _
  %s9 = ssub.s32 1, %s7
  %s10 = scalar_select 0, %s9, %s7
  %v11 = vstv %s5
  %12 = vst [vmem:[#allocation2] sm:$0x1] %v11
  $region1: #{tpu_custom_call.1} parent=0
    #allocation3 [shape = 'u8[4096]{0}', space=vmem, size = 0x1000, scoped, tag = 'input window, operand 0, single buffered']
    #allocation4 [shape = 's32[1]{0}', space=sflag, size = 0x4, scoped, tag = 'scoped memory for tpu_custom_call.1']
    #allocation5 [shape = 'u8[20480]{0}', space=vmem, size = 0x5000, scoped, tag = 'input window, operand 1, single buffered']
    #allocation6 [shape = 's32[1]{0}', space=sflag, size = 0x4, scoped, tag = 'scoped memory for tpu_custom_call.1']
    #allocation7 [shape = 'u8[65536]{0}', space=vmem, size = 0x10000, scoped, tag = 'input window, operand 2, single buffered']
    %13 = vsyncpa [#allocation4], 0
    %14 = vsyncpa [#allocation6], 0
    // Predicated region
    $region2: #{tpu_custom_call.1} parent=1 // pred_check
      _
    $region3: #{tpu_custom_call.1} parent=1 // pred_check_branch
      %16 = sbr.rel (0) target = $region5
    $region4: #{tpu_custom_call.1} parent=1 // pred_region
      %s18 = ssub.s32 128, 128
      %19 = vsyncadd [#allocation4], %s18
      %s21 = sshll.u32 [#allocation3], 4
      %s22 = int_to_ptr.vmem [resolvable:$true] %s21
      %24 = dma.hbm_to_vmem [thread:$0]  %s0, 128, %s22, [#allocation4]
    $region5: #{tpu_custom_call.1} parent=1 // pred_fallthru
      _
    // Predicated region
    $region6: #{tpu_custom_call.1} parent=1 // pred_check
      _
    $region7: #{tpu_custom_call.1} parent=1 // pred_check_branch
      %26 = sbr.rel (0) target = $region9
    $region8: #{tpu_custom_call.1} parent=1 // pred_region
      %s28 = ssub.s32 640, 640
      %29 = vsyncadd [#allocation6], %s28
      %s30 = sshll.u32 [#allocation5], 4
      %s31 = int_to_ptr.vmem [resolvable:$true] %s30
      %36 = dma.hbm_to_vmem [thread:$0]  %s1, 640, %s31, [#allocation6], 128, 128, 8
    $region9: #{tpu_custom_call.1} parent=1 // pred_fallthru
      _
    // Predicated region
    $region10: #{tpu_custom_call.1} parent=1 // pred_check
      _
    $region11: #{tpu_custom_call.1} parent=1 // pred_check_branch
      %38 = sbr.rel (0) target = $region13
    $region12: #{tpu_custom_call.1} parent=1 // pred_region
      %s40 = ssub.s32 2048, 2048
      %41 = vsyncadd [#allocation6], %s40
      %s42 = sshll.u32 [#allocation7], 4
      %s43 = int_to_ptr.vmem [resolvable:$true] %s42
      %48 = dma.hbm_to_vmem [thread:$0]  %s2, 2048, %s43, [#allocation6], 128, 128, 8
    $region13: #{tpu_custom_call.1} parent=1 // pred_fallthru
      _
    // Predicated region
    $region14: #{tpu_custom_call.1} parent=1 // pred_check
      _
    $region15: #{tpu_custom_call.1} parent=1 // pred_check_branch
      %50 = sbr.rel (0) target = $region17
    $region16: #{tpu_custom_call.1} parent=1 // pred_region
      _
    $region17: #{tpu_custom_call.1} parent=1 // pred_fallthru
      _
    // Predicated region
    $region18: #{tpu_custom_call.1} parent=1 // pred_check
      _
    $region19: #{tpu_custom_call.1} parent=1 // pred_check_branch
      %52 = sbr.rel (0) target = $region21
    $region20: #{tpu_custom_call.1} parent=1 // pred_region
      _
    $region21: #{tpu_custom_call.1} parent=1 // pred_fallthru
      _
    // Predicated region
    $region22: #{tpu_custom_call.1} parent=1 // pred_check
      _
    $region23: #{tpu_custom_call.1} parent=1 // pred_check_branch
      %54 = sbr.rel (0) target = $region25
    $region24: #{tpu_custom_call.1} parent=1 // pred_region
      _
    $region25: #{tpu_custom_call.1} parent=1 // pred_fallthru
      _
    // Predicated region
    $region26: #{tpu_custom_call.1} parent=1 // pred_check
      _
    $region27: #{tpu_custom_call.1} parent=1 // pred_check_branch
      %56 = sbr.rel (0) target = $region29
    $region28: #{tpu_custom_call.1} parent=1 // pred_region
      %57 = dma.done [#allocation4], 128
    $region29: #{tpu_custom_call.1} parent=1 // pred_fallthru
      _
    // Predicated region
    $region30: #{tpu_custom_call.1} parent=1 // pred_check
      _
    $region31: #{tpu_custom_call.1} parent=1 // pred_check_branch
      %59 = sbr.rel (0) target = $region33
    $region32: #{tpu_custom_call.1} parent=1 // pred_region
      %60 = dma.done [#allocation6], 640
    $region33: #{tpu_custom_call.1} parent=1 // pred_fallthru
      _
    // Predicated region
    $region34: #{tpu_custom_call.1} parent=1 // pred_check
      _
    $region35: #{tpu_custom_call.1} parent=1 // pred_check_branch
      %62 = sbr.rel (0) target = $region37
    $region36: #{tpu_custom_call.1} parent=1 // pred_region
      %63 = dma.done [#allocation6], 2048
    $region37: #{tpu_custom_call.1} parent=1 // pred_fallthru
      _
    %v64 = vld [vmem:[#allocation3] sm:$0xff]
    %v65 = vld [vmem:[#allocation5] sm:$0xff]
    %v66 = vld [vmem:[#allocation5 + $0x8] sm:$0xff]
    %v67 = vld [vmem:[#allocation5 + $0x10] sm:$0xff]
    %v68 = vld [vmem:[#allocation5 + $0x18] sm:$0xff]
    %v69 = vld [vmem:[#allocation5 + $0x20] sm:$0xf]
    %v70 = vld [vmem:[%s3] sm:$0x1]
    %v71 = vlaneseq
    %v72 = vshrl.u32 %v71, 7
    %v73 = vsub.s32 0, %v72
    %v74 = vrot.slane %v70, %v73
    %vm75 = vcmask 293888
    %v77 = vsel %vm75, %v64, 0
    %vm79 = vcmask 1043456
    %v81 = vsel %vm79, %v69, 0
    %83 = vmatprep.subr.mxu0 0.0
    %84 = vmatpush1.msra.mxu0 0.0
    %85 = vmatprep.subr.mxu0 0.0
    %86 = vmatpush1.msra.mxu0 0.0
    %87 = vmatprep.subr.mxu0 0.0
    %88 = vmatpush1.msra.mxu0 0.0
    %89 = vmatprep.subr.mxu0 0.0
    %90 = vmatpush1.msra.mxu0 0.0
    %91 = vmatprep.subr.mxu0 0.0
    %92 = vmatpush1.msra.mxu0 0.0
    %93 = vmatprep.subr.mxu0 0.0
    %94 = vmatpush1.msra.mxu0 0.0
    %95 = vmatprep.subr.mxu0 0.0
    %96 = vmatpush1.msra.mxu0 0.0
    %97 = vmatprep.subr.mxu0 0.0
    %98 = vmatpush1.msra.mxu0 0.0
    %99 = vmatprep.subr.mxu0 0.0
    %100 = vmatpush1.msra.mxu0 0.0
    %101 = vmatprep.subr.mxu0 0.0
    %102 = vmatpush1.msra.mxu0 0.0
    %103 = vmatprep.subr.mxu0 0.0
    %104 = vmatpush1.msra.mxu0 0.0
    %105 = vmatprep.subr.mxu0 0.0
    %106 = vmatpush1.msra.mxu0 %v81
    %107 = vmatprep.subr.mxu0 0.0
    %108 = vmatpush1.msra.mxu0 %v68
    %109 = vmatprep.subr.mxu0 0.0
    %110 = vmatpush1.msra.mxu0 %v67
    %111 = vmatprep.subr.mxu0 0.0
    %112 = vmatpush1.msra.mxu0 %v66
    %113 = vmatprep.subr.mxu0 0.0
    %114 = vmatpush1.msra.mxu0 %v65
    %115 = vmatprep.subr.mxu0 0.0
    %116 = vmatpush2.msra.mxu0 0.0
    %117 = vmatprep.subr.mxu0 0.0
    %118 = vmatpush2.msra.mxu0 0.0
    %119 = vmatprep.subr.mxu0 0.0
    %120 = vmatpush2.msra.mxu0 0.0
    %121 = vmatprep.subr.mxu0 0.0
    %122 = vmatpush2.msra.mxu0 0.0
    %123 = vmatprep.subr.mxu0 0.0
    %124 = vmatpush2.msra.mxu0 0.0
    %125 = vmatprep.subr.mxu0 0.0
    %126 = vmatpush2.msra.mxu0 0.0
    %127 = vmatprep.subr.mxu0 0.0
    %128 = vmatpush2.msra.mxu0 0.0
    %129 = vmatprep.subr.mxu0 0.0
    %130 = vmatpush2.msra.mxu0 0.0
    %131 = vmatprep.subr.mxu0 0.0
    %132 = vmatpush2.msra.mxu0 0.0
    %133 = vmatprep.subr.mxu0 0.0
    %134 = vmatpush2.msra.mxu0 0.0
    %135 = vmatprep.subr.mxu0 0.0
    %136 = vmatpush2.msra.mxu0 0.0
    %137 = vmatprep.subr.mxu0 0.0
    %138 = vmatpush2.msra.mxu0 0.0
    %139 = vmatprep.subr.mxu0 0.0
    %140 = vmatpush2.msra.mxu0 0.0
    %141 = vmatprep.subr.mxu0 0.0
    %142 = vmatpush2.msra.mxu0 0.0
    %143 = vmatprep.subr.mxu0 0.0
    %144 = vmatpush2.msra.mxu0 0.0
    %145 = vmatprep.subr.mxu0 0.0
    %146 = vmatpush2.msra.mxu0 0.0
    %147 = vmatprep.mubr.f32.mxu0 0.0
    %148 = vmatmul.mubr.f32.gmra.mxu0 %v77
    %v149 = vpop.f32.mrf.mxu0
    %v150 = vadd.f32 %v74, %v149
    %v151 = vpop.f32.mrf.mxu0
    %152 = vdwg.mxu0
    %v153 = vmax.f32 %v150, 0.0
    %v154 = vld [vmem:[#allocation7] sm:$0xff]
    %v155 = vld [vmem:[#allocation7 + $0x8] sm:$0xff]
    %v156 = vld [vmem:[#allocation7 + $0x10] sm:$0xff]
    %v157 = vld [vmem:[#allocation7 + $0x18] sm:$0xff]
    %v158 = vld [vmem:[#allocation7 + $0x20] sm:$0xff]
    %v159 = vld [vmem:[#allocation7 + $0x28] sm:$0xff]
    %v160 = vld [vmem:[#allocation7 + $0x30] sm:$0xff]
    %v161 = vld [vmem:[#allocation7 + $0x38] sm:$0xff]
    %v162 = vld [vmem:[%s3 + $0x1] sm:$0x1]
    %v163 = vlaneseq
    %v164 = vshrl.u32 %v163, 7
    %v165 = vsub.s32 0, %v164
    %v166 = vrot.slane %v162, %v165
    %vm167 = vcmask 523264
    %v169 = vsel %vm167, %v153, 0
    %171 = vmatprep.subr.mxu0 0.0
    %172 = vmatpush1.msra.mxu0 0.0
    %173 = vmatprep.subr.mxu0 0.0
    %174 = vmatpush1.msra.mxu0 0.0
    %175 = vmatprep.subr.mxu0 0.0
    %176 = vmatpush1.msra.mxu0 0.0
    %177 = vmatprep.subr.mxu0 0.0
    %178 = vmatpush1.msra.mxu0 0.0
    %179 = vmatprep.subr.mxu0 0.0
    %180 = vmatpush1.msra.mxu0 0.0
    %181 = vmatprep.subr.mxu0 0.0
    %182 = vmatpush1.msra.mxu0 0.0
    %183 = vmatprep.subr.mxu0 0.0
    %184 = vmatpush1.msra.mxu0 0.0
    %185 = vmatprep.subr.mxu0 0.0
    %186 = vmatpush1.msra.mxu0 0.0
    %187 = vmatprep.subr.mxu0 0.0
    %188 = vmatpush1.msra.mxu0 %v161
    %189 = vmatprep.subr.mxu0 0.0
    %190 = vmatpush1.msra.mxu0 %v160
    %191 = vmatprep.subr.mxu0 0.0
    %192 = vmatpush1.msra.mxu0 %v159
    %193 = vmatprep.subr.mxu0 0.0
    %194 = vmatpush1.msra.mxu0 %v158
    %195 = vmatprep.subr.mxu0 0.0
    %196 = vmatpush1.msra.mxu0 %v157
    %197 = vmatprep.subr.mxu0 0.0
    %198 = vmatpush1.msra.mxu0 %v156
    %199 = vmatprep.subr.mxu0 0.0
    %200 = vmatpush1.msra.mxu0 %v155
    %201 = vmatprep.subr.mxu0 0.0
    %202 = vmatpush1.msra.mxu0 %v154
    %203 = vmatprep.subr.mxu0 0.0
    %204 = vmatpush2.msra.mxu0 0.0
    %205 = vmatprep.subr.mxu0 0.0
    %206 = vmatpush2.msra.mxu0 0.0
    %207 = vmatprep.subr.mxu0 0.0
    %208 = vmatpush2.msra.mxu0 0.0
    %209 = vmatprep.subr.mxu0 0.0
    %210 = vmatpush2.msra.mxu0 0.0
    %211 = vmatprep.subr.mxu0 0.0
    %212 = vmatpush2.msra.mxu0 0.0
    %213 = vmatprep.subr.mxu0 0.0
    %214 = vmatpush2.msra.mxu0 0.0
    %215 = vmatprep.subr.mxu0 0.0
    %216 = vmatpush2.msra.mxu0 0.0
    %217 = vmatprep.subr.mxu0 0.0
    %218 = vmatpush2.msra.mxu0 0.0
    %219 = vmatprep.subr.mxu0 0.0
    %220 = vmatpush2.msra.mxu0 0.0
    %221 = vmatprep.subr.mxu0 0.0
    %222 = vmatpush2.msra.mxu0 0.0
    %223 = vmatprep.subr.mxu0 0.0
    %224 = vmatpush2.msra.mxu0 0.0
    %225 = vmatprep.subr.mxu0 0.0
    %226 = vmatpush2.msra.mxu0 0.0
    %227 = vmatprep.subr.mxu0 0.0
    %228 = vmatpush2.msra.mxu0 0.0
    %229 = vmatprep.subr.mxu0 0.0
    %230 = vmatpush2.msra.mxu0 0.0
    %231 = vmatprep.subr.mxu0 0.0
    %232 = vmatpush2.msra.mxu0 0.0
    %233 = vmatprep.subr.mxu0 0.0
    %234 = vmatpush2.msra.mxu0 0.0
    %235 = vmatprep.mubr.f32.mxu0 0.0
    %236 = vmatmul.mubr.f32.gmra.mxu0 %v169
    %v237 = vpop.f32.mrf.mxu0
    %v238 = vadd.f32 %v166, %v237
    %v239 = vpop.f32.mrf.mxu0
    %240 = vdwg.mxu0
    %v241 = vmax.f32 %v238, 0.0
    %s242 = scalar_lea.vmem [#allocation7], 64
    %v243 = vld [vmem:[%s242] sm:$0xff]
    %v244 = vld [vmem:[%s242 + $0x8] sm:$0xff]
    %v245 = vld [vmem:[%s242 + $0x10] sm:$0xff]
    %v246 = vld [vmem:[%s242 + $0x18] sm:$0xff]
    %v247 = vld [vmem:[%s242 + $0x20] sm:$0xff]
    %v248 = vld [vmem:[%s242 + $0x28] sm:$0xff]
    %v249 = vld [vmem:[%s242 + $0x30] sm:$0xff]
    %v250 = vld [vmem:[%s242 + $0x38] sm:$0xff]
    %v251 = vld [vmem:[%s3 + $0x2] sm:$0x1]
    %v252 = vlaneseq
    %v253 = vshrl.u32 %v252, 7
    %v254 = vsub.s32 0, %v253
    %v255 = vrot.slane %v251, %v254
    %v257 = vsel %vm167, %v241, 0
    %259 = vmatprep.subr.mxu0 0.0
    %260 = vmatpush1.msra.mxu0 0.0
    %261 = vmatprep.subr.mxu0 0.0
    %262 = vmatpush1.msra.mxu0 0.0
    %263 = vmatprep.subr.mxu0 0.0
    %264 = vmatpush1.msra.mxu0 0.0
    %265 = vmatprep.subr.mxu0 0.0
    %266 = vmatpush1.msra.mxu0 0.0
    %267 = vmatprep.subr.mxu0 0.0
    %268 = vmatpush1.msra.mxu0 0.0
    %269 = vmatprep.subr.mxu0 0.0
    %270 = vmatpush1.msra.mxu0 0.0
    %271 = vmatprep.subr.mxu0 0.0
    %272 = vmatpush1.msra.mxu0 0.0
    %273 = vmatprep.subr.mxu0 0.0
    %274 = vmatpush1.msra.mxu0 0.0
    %275 = vmatprep.subr.mxu0 0.0
    %276 = vmatpush1.msra.mxu0 %v250
    %277 = vmatprep.subr.mxu0 0.0
    %278 = vmatpush1.msra.mxu0 %v249
    %279 = vmatprep.subr.mxu0 0.0
    %280 = vmatpush1.msra.mxu0 %v248
    %281 = vmatprep.subr.mxu0 0.0
    %282 = vmatpush1.msra.mxu0 %v247
    %283 = vmatprep.subr.mxu0 0.0
    %284 = vmatpush1.msra.mxu0 %v246
    %285 = vmatprep.subr.mxu0 0.0
    %286 = vmatpush1.msra.mxu0 %v245
    %287 = vmatprep.subr.mxu0 0.0
    %288 = vmatpush1.msra.mxu0 %v244
    %289 = vmatprep.subr.mxu0 0.0
    %290 = vmatpush1.msra.mxu0 %v243
    %291 = vmatprep.subr.mxu0 0.0
    %292 = vmatpush2.msra.mxu0 0.0
    %293 = vmatprep.subr.mxu0 0.0
    %294 = vmatpush2.msra.mxu0 0.0
    %295 = vmatprep.subr.mxu0 0.0
    %296 = vmatpush2.msra.mxu0 0.0
    %297 = vmatprep.subr.mxu0 0.0
    %298 = vmatpush2.msra.mxu0 0.0
    %299 = vmatprep.subr.mxu0 0.0
    %300 = vmatpush2.msra.mxu0 0.0
    %301 = vmatprep.subr.mxu0 0.0
    %302 = vmatpush2.msra.mxu0 0.0
    %303 = vmatprep.subr.mxu0 0.0
    %304 = vmatpush2.msra.mxu0 0.0
    %305 = vmatprep.subr.mxu0 0.0
    %306 = vmatpush2.msra.mxu0 0.0
    %307 = vmatprep.subr.mxu0 0.0
    %308 = vmatpush2.msra.mxu0 0.0
    %309 = vmatprep.subr.mxu0 0.0
    %310 = vmatpush2.msra.mxu0 0.0
    %311 = vmatprep.subr.mxu0 0.0
    %312 = vmatpush2.msra.mxu0 0.0
    %313 = vmatprep.subr.mxu0 0.0
    %314 = vmatpush2.msra.mxu0 0.0
    %315 = vmatprep.subr.mxu0 0.0
    %316 = vmatpush2.msra.mxu0 0.0
    %317 = vmatprep.subr.mxu0 0.0
    %318 = vmatpush2.msra.mxu0 0.0
    %319 = vmatprep.subr.mxu0 0.0
    %320 = vmatpush2.msra.mxu0 0.0
    %321 = vmatprep.subr.mxu0 0.0
    %322 = vmatpush2.msra.mxu0 0.0
    %323 = vmatprep.mubr.f32.mxu0 0.0
    %324 = vmatmul.mubr.f32.gmra.mxu0 %v257
    %v325 = vpop.f32.mrf.mxu0
    %v326 = vadd.f32 %v255, %v325
    %v327 = vpop.f32.mrf.mxu0
    %328 = vdwg.mxu0
    %v329 = vmax.f32 %v326, 0.0
    %v330 = vld [vmem:[%s4] sm:$0x1]
    %v332 = vlaneseq
    %v333 = vshrl.u32 %v332, 7
    %v334 = vsub.s32 0, %v333
    %v335 = vrot.slane %v330, %v334
    %v337 = vmul.f32 %v329, %v335
    %v338 = vsel %vm167, %v337, 0.0
    %339 = vadd.xlane.f32.xlu0 %v338
    %v340 = vpop.xlane.xlu0 %339
    %v341 = vld [vmem:[#allocation2] sm:$0x1]
    %v343 = vlaneseq
    %v344 = vshrl.u32 %v343, 7
    %v345 = vsub.s32 0, %v344
    %v346 = vrot.slane %v341, %v345
    %v348 = vadd.f32 %v340, %v346
    %vm349 = vcmask 7168
    %350 = vst.msk [vmem:[%s6] sm:$0xff] %vm349, %v348
    // Predicated region
    $region38: #{tpu_custom_call.1} parent=1 // pred_check
      _
    $region39: #{tpu_custom_call.1} parent=1 // pred_check_branch
      %352 = sbr.rel (0) target = $region41
    $region40: #{tpu_custom_call.1} parent=1 // pred_region
      _
    $region41: #{tpu_custom_call.1} parent=1 // pred_fallthru
      _
    // Predicated region
    $region42: #{tpu_custom_call.1} parent=1 // pred_check
      _
    $region43: #{tpu_custom_call.1} parent=1 // pred_check_branch
      %354 = sbr.rel (0) target = $region45
    $region44: #{tpu_custom_call.1} parent=1 // pred_region
      _
    $region45: #{tpu_custom_call.1} parent=1 // pred_fallthru
      _
    %355 = vsyncpa [#allocation4], 1
    %356 = vsyncpa [#allocation6], 1

</llo_original>
